<compile_context>
chip_gen: v7x
topology: tpu7x:2x2x1
jax: 0.10.0
libtpu: 0.0.40
codegen_flags: <defaults>
</compile_context>

<pallas_src>
import functools

import jax
import jax.numpy as jnp
from jax.experimental import pallas as pl
from jax.experimental.pallas import tpu as pltpu


def _chamfer_kernel(sim_ref, out_ref, acc_ref, *, cq_total, cs):
    """One (T, tcq, Cs) block; partial Cq sums accumulated over grid axis 1."""
    k = pl.program_id(1)

    @pl.when(k == 0)
    def _():
        acc_ref[...] = jnp.zeros_like(acc_ref)

    # Fold Cs in 128-lane chunks with elementwise maximum (VPU) so only a
    # single 128-wide cross-lane reduce remains per (row, query-clip) pair.
    if cs > 128 and cs % 128 == 0:
        m = sim_ref[:, :, 0:128]
        for c in range(1, cs // 128):
            m = jnp.maximum(m, sim_ref[:, :, c * 128:(c + 1) * 128])
    else:
        m = sim_ref[...]

    # Max over support clips: lane reduce with keepdims (no relayout of the
    # large intermediate).  Mean over query clips: sublane-axis sum in f32.
    row_max = jnp.max(m, axis=-1, keepdims=True)                   # (T, tcq, 1)
    acc_ref[...] += jnp.sum(row_max.astype(jnp.float32), axis=-2)  # (T, 1)

    @pl.when(k == pl.num_programs(1) - 1)
    def _():
        out_ref[...] = (acc_ref[...] * (1.0 / cq_total)).astype(out_ref.dtype)


def _vmem_capacity_bytes():
    try:
        return int(pltpu.get_tpu_info().vmem_capacity_bytes)
    except Exception:
        return 64 << 20  # conservative: assume v7x-sized per-core VMEM


def _pick_row_tile(n_rows, bytes_per_row, budget_bytes):
    """Row-block size T: multiple of 128 (or full), near the byte budget,
    but capped so the grid keeps >=2 (ideally >=4) parallel steps."""
    if n_rows <= 128:
        return n_rows  # single full block (output last-two dims stay 'full')
    t_budget = max(128, (budget_bytes // bytes_per_row) // 128 * 128)
    n_blocks_128 = -(-n_rows // 128)
    desired_steps = min(4, n_blocks_128)
    t_cap = max(128, (n_rows // desired_steps) // 128 * 128)
    t = min(t_budget, t_cap, n_blocks_128 * 128)
    # Prefer a tile that divides n_rows exactly (avoid a padded tail block).
    for cand in range(t, 127, -128):
        if n_rows % cand == 0:
            return cand
    return t


def _pick_cq_tile(cq, cs, itemsize, t_rows, budget_bytes):
    """Split Cq (reduction axis) only if needed; must divide Cq exactly so no
    padding garbage enters the max/mean."""
    if t_rows * cq * cs * itemsize <= budget_bytes or cq <= 8:
        return cq
    divisors = [d for d in range(8, cq, 8) if cq % d == 0]
    if not divisors:
        return cq  # cannot split cleanly; accept an over-budget full-Cq block
    fitting = [d for d in divisors if t_rows * d * cs * itemsize <= budget_bytes]
    return max(fitting) if fitting else min(divisors)


def chamfer_matching(similarity, *, block_budget_bytes=None):
    """Pallas implementation of ChamferMatching.forward.

    :param similarity: [Q, S, Cq, Cs] frame-to-frame similarity tensor.
    :return: [Q, S] video-to-video similarity scores.
    """
    Q, S, Cq, Cs = similarity.shape
    N = Q * S
    itemsize = jnp.dtype(similarity.dtype).itemsize
    vmem_cap = _vmem_capacity_bytes()

    if block_budget_bytes is None:
        # ~12 MiB on v7x (64 MiB VMEM, 3.2 TB/s), ~8 MiB on v5e/v6e (128 MiB).
        block_budget_bytes = (12 << 20) if vmem_cap <= (64 << 20) else (8 << 20)

    t = _pick_row_tile(N, Cq * Cs * itemsize, block_budget_bytes)
    tcq = _pick_cq_tile(Cq, Cs, itemsize, t, block_budget_bytes)
    grid = (pl.cdiv(N, t), pl.cdiv(Cq, tcq))

    # Scoped-VMEM sizing: double-buffered input/output blocks + f32 scratch.
    in_block = t * tcq * Cs * itemsize
    out_block = t * 128 * itemsize           # (t, 1) block padded to 128 lanes
    acc_block = t * 128 * 4
    need = 2 * in_block + 2 * out_block + acc_block + (2 << 20)
    ceiling = min(vmem_cap - (8 << 20), 100 << 20)   # ~56 MiB v7x, 100 MiB v5e/v6e
    vmem_limit = int(min(max(need, 32 << 20), ceiling))  # never below gen default

    sim_rows = similarity.reshape(N, Cq, Cs)
    kernel = functools.partial(_chamfer_kernel, cq_total=Cq, cs=Cs)

    out_flat = pl.pallas_call(
        kernel,
        out_shape=jax.ShapeDtypeStruct((N, 1), similarity.dtype),
        grid_spec=pltpu.PrefetchScalarGridSpec(
            num_scalar_prefetch=0,
            grid=grid,
            in_specs=[pl.BlockSpec((t, tcq, Cs), lambda i, k: (i, k, 0))],
            out_specs=pl.BlockSpec((t, 1), lambda i, k: (i, 0)),
            scratch_shapes=[pltpu.VMEM((t, 1), jnp.float32)],
        ),
        compiler_params=pltpu.CompilerParams(
            dimension_semantics=("parallel", "arbitrary"),
            vmem_limit_bytes=vmem_limit,
        ),
    )(sim_rows)
    return out_flat.reshape(Q, S)


def chamfer_matching_ref(similarity):
    # Pure-JAX reference mirroring the PyTorch semantics (f32 accumulation).
    return jnp.mean(jnp.max(similarity.astype(jnp.float32), axis=-1), axis=-1)


if __name__ == "__main__":
    key = jax.random.PRNGKey(0)
    k1, k2, k3, k4 = jax.random.split(key, 4)

    # Test 1: small shape, single grid step (full-array blocks).
    Q, S, Cq, Cs = 2, 4, 8, 128
    sim = jax.random.uniform(k1, (Q, S, Cq, Cs), dtype=jnp.float32)
    out = jax.block_until_ready(chamfer_matching(sim))
    ref = chamfer_matching_ref(sim)
    assert out.shape == (Q, S)
    assert jnp.allclose(out, ref, atol=1e-5, rtol=1e-5)

    # Test 2: multi-step row grid + Cs>128 chunked VPU max fold (no Cq split).
    Q2, S2, Cq2, Cs2 = 16, 16, 8, 256
    sim2 = jax.random.normal(k2, (Q2, S2, Cq2, Cs2), dtype=jnp.float32)
    out2 = jax.block_until_ready(
        chamfer_matching(sim2, block_budget_bytes=256 * 1024))
    ref2 = chamfer_matching_ref(sim2)
    assert out2.shape == (Q2, S2)
    assert jnp.allclose(out2, ref2, atol=1e-5, rtol=1e-5)

    # Test 3: tiny budget forces the Cq-split (accumulator) path, grid=(2, 4).
    Q3, S3, Cq3, Cs3 = 8, 32, 32, 256
    sim3 = jax.random.normal(k3, (Q3, S3, Cq3, Cs3), dtype=jnp.float32)
    out3 = jax.block_until_ready(
        chamfer_matching(sim3, block_budget_bytes=1 << 20))
    ref3 = chamfer_matching_ref(sim3)
    assert out3.shape == (Q3, S3)
    assert jnp.allclose(out3, ref3, atol=1e-5, rtol=1e-5)

    # Test 4: ragged row count (padded tail block) + bf16 input / f32 accumulate.
    Q4, S4, Cq4, Cs4 = 3, 50, 8, 128
    sim4 = jax.random.uniform(k4, (Q4, S4, Cq4, Cs4), dtype=jnp.bfloat16)
    out4 = jax.block_until_ready(chamfer_matching(sim4))
    ref4 = chamfer_matching_ref(sim4)
    assert out4.shape == (Q4, S4)
    assert jnp.allclose(out4.astype(jnp.float32), ref4, atol=2e-2, rtol=2e-2)

    print("KERNEL_OK")
</pallas_src>

<mosaic_0001>
module attributes {stable_mosaic.version = 11 : i64} {
  func.func @_chamfer_kernel(%arg0: i32, %arg1: i32, %arg2: memref<8x8x128xf32, #tpu.memory_space<vmem>>, %arg3: memref<8x1xf32, #tpu.memory_space<vmem>>, %arg4: memref<8x1xf32, #tpu.memory_space<vmem>>) attributes {dimension_semantics = [#tpu.dimension_semantics<parallel>, #tpu.dimension_semantics<arbitrary>], iteration_bounds = array<i64: 1, 1>, scalar_prefetch = 0 : i64, scratch_operands = 1 : i64, tpu.core_type = #tpu.core_type<tc>, window_params = [{transform_indices = @transform_0, window_bounds = array<i64: 8, 8, 128>}, {transform_indices = @transform_1, window_bounds = array<i64: 8, 1>}]} {
    %c0_i32 = arith.constant 0 : i32
    %0 = arith.cmpi eq, %arg1, %c0_i32 : i32
    %1 = arith.extui %0 : i1 to i32
    %c0_i32_0 = arith.constant 0 : i32
    %2 = arith.cmpi ne, %1, %c0_i32_0 : i32
    scf.if %2 {
      %cst_10 = arith.constant 0.000000e+00 : f32
      %13 = vector.broadcast %cst_10 : f32 to vector<8x1xf32>
      %c0_11 = arith.constant 0 : index
      %c0_12 = arith.constant 0 : index
      %14 = vector.load %arg4[%c0_11, %c0_12] : memref<8x1xf32, #tpu.memory_space<vmem>>, vector<8x1xf32>
      tpu.vector_store %arg4[%c0_11, %c0_12], %13 {strides = array<i32>} : memref<8x1xf32, #tpu.memory_space<vmem>>, vector<8x1xf32>,
    } else {
    }
    %c0 = arith.constant 0 : index
    %c0_1 = arith.constant 0 : index
    %c0_2 = arith.constant 0 : index
    %3 = vector.load %arg2[%c0, %c0_1, %c0_2] : memref<8x8x128xf32, #tpu.memory_space<vmem>>, vector<8x8x128xf32>
    %cst = arith.constant dense<0xFF800000> : vector<8x8xf32>
    %4 = vector.multi_reduction <maximumf>, %3, %cst [2] : vector<8x8x128xf32> to vector<8x8xf32>
    %5 = vector.shape_cast %4 : vector<8x8xf32> to vector<8x8x1xf32>
    %c0_3 = arith.constant 0 : index
    %c0_4 = arith.constant 0 : index
    %6 = vector.load %arg4[%c0_3, %c0_4] : memref<8x1xf32, #tpu.memory_space<vmem>>, vector<8x1xf32>
    %cst_5 = arith.constant dense<0.000000e+00> : vector<8x1xf32>
    %7 = vector.multi_reduction <add>, %5, %cst_5 [1] : vector<8x8x1xf32> to vector<8x1xf32>
    %8 = arith.addf %6, %7 : vector<8x1xf32>
    %c0_6 = arith.constant 0 : index
    %c0_7 = arith.constant 0 : index
    %9 = vector.load %arg4[%c0_6, %c0_7] : memref<8x1xf32, #tpu.memory_space<vmem>>, vector<8x1xf32>
    tpu.vector_store %arg4[%c0_6, %c0_7], %8 {strides = array<i32>} : memref<8x1xf32, #tpu.memory_space<vmem>>, vector<8x1xf32>,
    %c0_i32_8 = arith.constant 0 : i32
    %10 = arith.cmpi eq, %arg1, %c0_i32_8 : i32
    %11 = arith.extui %10 : i1 to i32
    %c0_i32_9 = arith.constant 0 : i32
    %12 = arith.cmpi ne, %11, %c0_i32_9 : i32
    scf.if %12 {
      %c0_10 = arith.constant 0 : index
      %c0_11 = arith.constant 0 : index
      %13 = vector.load %arg4[%c0_10, %c0_11] : memref<8x1xf32, #tpu.memory_space<vmem>>, vector<8x1xf32>
      %cst_12 = arith.constant 1.250000e-01 : f32
      %14 = vector.broadcast %cst_12 : f32 to vector<8x1xf32>
      %15 = arith.mulf %13, %14 : vector<8x1xf32>
      %c0_13 = arith.constant 0 : index
      %c0_14 = arith.constant 0 : index
      %16 = vector.load %arg3[%c0_13, %c0_14] : memref<8x1xf32, #tpu.memory_space<vmem>>, vector<8x1xf32>
      tpu.vector_store %arg3[%c0_13, %c0_14], %15 {strides = array<i32>} : memref<8x1xf32, #tpu.memory_space<vmem>>, vector<8x1xf32>,
    } else {
    }
    return
  }
  func.func @transform_0(%arg0: i32, %arg1: i32) -> (i32, i32, i32) {
    %c0_i32 = arith.constant 0 : i32
    %c0_i32_0 = arith.constant 0 : i32
    return %arg0, %arg1, %c0_i32 : i32, i32, i32
  }
  func.func @transform_1(%arg0: i32, %arg1: i32) -> (i32, i32) {
    %c0_i32 = arith.constant 0 : i32
    %c0_i32_0 = arith.constant 0 : i32
    return %arg0, %c0_i32 : i32, i32
  }
}

</mosaic_0001>

<llo_original>
// kernel: tpu_custom_call.1
$region0: #{tpu_custom_call.1}
  #allocation0 [shape = 'u32[]', space=smem, size = 0x4, offset = 0x4, fixed_abs, tag = 'smem constant byte address 0x4 - core index']
  #allocation1 [shape = 'u32[144,128]{1,0:T(1,128)}', space=vmem, size = 0x12000, scoped, tag = 'internal scratch']
  #allocation2 [shape = 'f32[8,1]{1,0:T(8,128)}', space=vmem, size = 0x1000, scoped, tag = 'scratch operand']
  %s0 = inlined_call_operand.hbm [shape: f32[8,8,128], index: 0, kind: input, shape index: {}]
  %s1 = inlined_call_operand.vmem [shape: f32[8,1], index: 1, kind: output, shape index: {}]
  %s2 = sld [smem:[#allocation0]]
  $region26: #{tpu_custom_call.1} parent=0
    _
  %s4 = ssub.s32 1, %s2
  %s5 = scalar_select 0, %s4, %s2
  $region1: #{tpu_custom_call.1} parent=0
    #allocation3 [shape = 'u8[32768]{0}', space=vmem, size = 0x8000, scoped, tag = 'input window, operand 0, single buffered']
    #allocation4 [shape = 's32[1]{0}', space=sflag, size = 0x4, scoped, tag = 'scoped memory for tpu_custom_call.1']
    %6 = vsyncpa [#allocation4], 0
    // Predicated region
    $region2: #{tpu_custom_call.1} parent=1 // pred_check
      _
    $region3: #{tpu_custom_call.1} parent=1 // pred_check_branch
      %8 = sbr.rel (0) target = $region5
    $region4: #{tpu_custom_call.1} parent=1 // pred_region
      %s10 = ssub.s32 1024, 1024
      %11 = vsyncadd [#allocation4], %s10
      %s12 = sshll.u32 [#allocation3], 4
      %s13 = int_to_ptr.vmem [resolvable:$true] %s12
      %18 = dma.hbm_to_vmem [thread:$0]  %s0, 1024, %s13, [#allocation4], 128, 128, 8
    $region5: #{tpu_custom_call.1} parent=1 // pred_fallthru
      _
    // Predicated region
    $region6: #{tpu_custom_call.1} parent=1 // pred_check
      _
    $region7: #{tpu_custom_call.1} parent=1 // pred_check_branch
      %20 = sbr.rel (0) target = $region9
    $region8: #{tpu_custom_call.1} parent=1 // pred_region
      %21 = dma.done [#allocation4], 1024
    $region9: #{tpu_custom_call.1} parent=1 // pred_fallthru
      _
    %p22 = scmp.eq.s32.totalorder 0, 0
    // Predicated region
    $region10: #{tpu_custom_call.1} parent=1 // pred_check
      %p23 = pneg %p22
    $region11: #{tpu_custom_call.1} parent=1 // pred_check_branch
      %25 = sbr.rel (%p23) target = $region13
    $region12: #{tpu_custom_call.1} parent=1 // pred_region
      %vm26 = vcmask 7168
      %27 = vst.msk [vmem:[#allocation2] sm:$0xff] %vm26, 0.0
    $region13: #{tpu_custom_call.1} parent=1 // pred_fallthru
      _
    %v28 = vld [vmem:[#allocation3] sm:$0xff]
    %v29 = vld [vmem:[#allocation3 + $0x8] sm:$0xff]
    %v30 = vld [vmem:[#allocation3 + $0x10] sm:$0xff]
    %v31 = vld [vmem:[#allocation3 + $0x18] sm:$0xff]
    %v32 = vld [vmem:[#allocation3 + $0x20] sm:$0xff]
    %v33 = vld [vmem:[#allocation3 + $0x28] sm:$0xff]
    %v34 = vld [vmem:[#allocation3 + $0x30] sm:$0xff]
    %v35 = vld [vmem:[#allocation3 + $0x38] sm:$0xff]
    %36 = vmax.xlane.f32.xlu0 %v28
    %v37 = vpop.xlane.xlu0 %36
    %38 = vmax.xlane.f32.xlu0 %v29
    %v39 = vpop.xlane.xlu0 %38
    %40 = vmax.xlane.f32.xlu0 %v30
    %v41 = vpop.xlane.xlu0 %40
    %42 = vmax.xlane.f32.xlu0 %v31
    %v43 = vpop.xlane.xlu0 %42
    %44 = vmax.xlane.f32.xlu0 %v32
    %v45 = vpop.xlane.xlu0 %44
    %46 = vmax.xlane.f32.xlu0 %v33
    %v47 = vpop.xlane.xlu0 %46
    %48 = vmax.xlane.f32.xlu0 %v34
    %v49 = vpop.xlane.xlu0 %48
    %50 = vmax.xlane.f32.xlu0 %v35
    %v51 = vpop.xlane.xlu0 %50
    %v52 = vld [vmem:[#allocation2] sm:$0xff]
    %v53 = vrot.slane %v37, 4
    %v54 = vadd.f32 %v37, %v53
    %v55 = vrot.slane %v54, 2
    %v56 = vadd.f32 %v54, %v55
    %v57 = vrot.slane %v56, 1
    %v58 = vadd.f32 %v56, %v57
    %v59 = vrot.slane %v39, 4
    %v60 = vadd.f32 %v39, %v59
    %v61 = vrot.slane %v60, 2
    %v62 = vadd.f32 %v60, %v61
    %v63 = vrot.slane %v62, 1
    %v64 = vadd.f32 %v62, %v63
    %v65 = vrot.slane %v41, 4
    %v66 = vadd.f32 %v41, %v65
    %v67 = vrot.slane %v66, 2
    %v68 = vadd.f32 %v66, %v67
    %v69 = vrot.slane %v68, 1
    %v70 = vadd.f32 %v68, %v69
    %v71 = vrot.slane %v43, 4
    %v72 = vadd.f32 %v43, %v71
    %v73 = vrot.slane %v72, 2
    %v74 = vadd.f32 %v72, %v73
    %v75 = vrot.slane %v74, 1
    %v76 = vadd.f32 %v74, %v75
    %v77 = vrot.slane %v45, 4
    %v78 = vadd.f32 %v45, %v77
    %v79 = vrot.slane %v78, 2
    %v80 = vadd.f32 %v78, %v79
    %v81 = vrot.slane %v80, 1
    %v82 = vadd.f32 %v80, %v81
    %v83 = vrot.slane %v47, 4
    %v84 = vadd.f32 %v47, %v83
    %v85 = vrot.slane %v84, 2
    %v86 = vadd.f32 %v84, %v85
    %v87 = vrot.slane %v86, 1
    %v88 = vadd.f32 %v86, %v87
    %v89 = vrot.slane %v49, 4
    %v90 = vadd.f32 %v49, %v89
    %v91 = vrot.slane %v90, 2
    %v92 = vadd.f32 %v90, %v91
    %v93 = vrot.slane %v92, 1
    %v94 = vadd.f32 %v92, %v93
    %v95 = vrot.slane %v51, 4
    %v96 = vadd.f32 %v51, %v95
    %v97 = vrot.slane %v96, 2
    %v98 = vadd.f32 %v96, %v97
    %v99 = vrot.slane %v98, 1
    %v100 = vadd.f32 %v98, %v99
    %vm109 = vcmask 1041409
    %v110 = vsel %vm109, %v64, %v58
    %vm111 = vcmask 1042434
    %v112 = vsel %vm111, %v70, %v110
    %vm113 = vcmask 1043459
    %v114 = vsel %vm113, %v76, %v112
    %vm115 = vcmask 1044484
    %v116 = vsel %vm115, %v82, %v114
    %vm117 = vcmask 1045509
    %v118 = vsel %vm117, %v88, %v116
    %vm119 = vcmask 1046534
    %v120 = vsel %vm119, %v94, %v118
    %vm121 = vcmask 1047559
    %v122 = vsel %vm121, %v100, %v120
    %v124 = vadd.f32 %v52, %v122
    %vm125 = vcmask 7168
    %126 = vst.msk [vmem:[#allocation2] sm:$0xff] %vm125, %v124
    // Predicated region
    $region14: #{tpu_custom_call.1} parent=1 // pred_check
      %p127 = pneg %p22
    $region15: #{tpu_custom_call.1} parent=1 // pred_check_branch
      %129 = sbr.rel (%p127) target = $region17
    $region16: #{tpu_custom_call.1} parent=1 // pred_region
      %v130 = vld [vmem:[#allocation2] sm:$0xff]
      %v131 = vmul.f32 %v130, 0.125
      %132 = vst.msk [vmem:[%s1] sm:$0xff] %vm125, %v131
    $region17: #{tpu_custom_call.1} parent=1 // pred_fallthru
      _
    // Predicated region
    $region18: #{tpu_custom_call.1} parent=1 // pred_check
      _
    $region19: #{tpu_custom_call.1} parent=1 // pred_check_branch
      %134 = sbr.rel (0) target = $region21
    $region20: #{tpu_custom_call.1} parent=1 // pred_region
      _
    $region21: #{tpu_custom_call.1} parent=1 // pred_fallthru
      _
    // Predicated region
    $region22: #{tpu_custom_call.1} parent=1 // pred_check
      _
    $region23: #{tpu_custom_call.1} parent=1 // pred_check_branch
      %136 = sbr.rel (0) target = $region25
    $region24: #{tpu_custom_call.1} parent=1 // pred_region
      _
    $region25: #{tpu_custom_call.1} parent=1 // pred_fallthru
      _
    %137 = vsyncpa [#allocation4], 1

</llo_original>
